<compile_context>
chip_gen: v5e
topology: v5e:2x2
jax: 0.10.0
libtpu: 0.0.40
codegen_flags: <defaults>
</compile_context>

<pallas_src>
import functools
import math

import jax
import jax.numpy as jnp
from jax.experimental import pallas as pl
from jax.experimental.pallas import tpu as pltpu

LANES = 128  # TPU lane width; all feature dims are padded to this.


def _round_up(x, m):
    return (x + m - 1) // m * m


def _pad2d(a, rows, cols, dtype):
    out = jnp.zeros((rows, cols), dtype)
    return out.at[: a.shape[0], : a.shape[1]].set(a.astype(dtype))


# ---------------------------------------------------------------------------
# Kernel 1: per-node feature transform  Z1 = X @ W1  (row-tiled, run once,
# hoisted out of the A-streaming loop).
# ---------------------------------------------------------------------------
def _xw_kernel(x_ref, w_ref, z_ref):
    z = jnp.dot(x_ref[...].astype(jnp.bfloat16), w_ref[...],
                preferred_element_type=jnp.float32)
    z_ref[...] = z.astype(z_ref.dtype)


# ---------------------------------------------------------------------------
# Kernel 2: tiled GCN aggregation with fused post-transform.
#   acc  = sum_k A[i, k-block] @ Z[k-block]        (bf16 in, f32 accumulate)
#   out  = relu(acc + b) @ W_post + b_post         (finalize on last K block)
# Used twice:
#   layer 1:  b = b1, W_post = W2, b_post = 0   ->  Z2   (bf16)
#   layer 2:  b = b2, W_post = W3, b_post = b3  ->  logits (f32)
# ---------------------------------------------------------------------------
def _gcn_agg_kernel(a_ref, z_ref, b_ref, wp_ref, bp_ref, out_ref, acc_ref):
    @pl.when(pl.program_id(1) == 0)
    def _init():
        acc_ref[...] = jnp.zeros_like(acc_ref)

    acc_ref[...] += jnp.dot(a_ref[...], z_ref[...],
                            preferred_element_type=jnp.float32)

    @pl.when(pl.program_id(1) == pl.num_programs(1) - 1)
    def _finalize():
        h = jnp.maximum(acc_ref[...] + b_ref[...], 0.0)
        out = jnp.dot(h.astype(jnp.bfloat16), wp_ref[...],
                      preferred_element_type=jnp.float32) + bp_ref[...]
        out_ref[...] = out.astype(out_ref.dtype)


@functools.partial(jax.jit, static_argnames=("tm", "tk"))
def fraud_gcn_forward(a_hat, x, w1, b1, w2, b2, w3, b3, *, tm=256, tk=512):
    n, f = x.shape
    out_dim = w3.shape[1]

    # ---- tile sizes / padded sizes ---------------------------------------
    n_min = _round_up(n, LANES)
    tm = min(tm, n_min)                      # row tile of A (multiple of 8)
    tk = min(tk, n_min)                      # K tile of A (multiple of 128)
    n_pad = _round_up(n, tm * tk // math.gcd(tm, tk))
    f_pad = _round_up(f, 8)

    # ---- pad operands to lane-dense, (8,128)-aligned shapes ---------------
    a_pad = _pad2d(a_hat, n_pad, n_pad, jnp.bfloat16)   # dominant buffer -> bf16
    x_pad = _pad2d(x, n_pad, f_pad, jnp.float32)
    w1p = _pad2d(w1, f_pad, LANES, jnp.bfloat16)
    w2p = _pad2d(w2, LANES, LANES, jnp.bfloat16)
    w3p = _pad2d(w3, LANES, LANES, jnp.bfloat16)
    b1p = _pad2d(b1, 1, LANES, jnp.float32)
    b2p = _pad2d(b2, 1, LANES, jnp.float32)
    b3p = _pad2d(b3, 1, LANES, jnp.float32)
    zero_bias = jnp.zeros((1, LANES), jnp.float32)

    rows = n_pad // tm
    kblocks = n_pad // tk

    # ---- stage 1: Z1 = X @ W1 (computed exactly once) ---------------------
    z1 = pl.pallas_call(
        _xw_kernel,
        out_shape=jax.ShapeDtypeStruct((n_pad, LANES), jnp.bfloat16),
        grid_spec=pltpu.PrefetchScalarGridSpec(
            num_scalar_prefetch=0,
            grid=(rows,),
            in_specs=[pl.BlockSpec((tm, f_pad), lambda i: (i, 0)),
                      pl.BlockSpec((f_pad, LANES), lambda i: (0, 0))],
            out_specs=pl.BlockSpec((tm, LANES), lambda i: (i, 0))),
        compiler_params=pltpu.CompilerParams(
            dimension_semantics=("parallel",)),
        cost_estimate=pl.CostEstimate(
            flops=2 * n_pad * f_pad * LANES,
            transcendentals=0,
            bytes_accessed=n_pad * f_pad * 4 + f_pad * LANES * 2
                           + n_pad * LANES * 2),
    )(x_pad, w1p)

    # ---- stages 2 & 3: tiled A_hat aggregation, fused post-transform ------
    def agg_layer(z, bias, w_post, b_post, out_dtype):
        out_bytes = n_pad * LANES * jnp.dtype(out_dtype).itemsize
        return pl.pallas_call(
            _gcn_agg_kernel,
            out_shape=jax.ShapeDtypeStruct((n_pad, LANES), out_dtype),
            grid_spec=pltpu.PrefetchScalarGridSpec(
                num_scalar_prefetch=0,
                grid=(rows, kblocks),
                in_specs=[
                    pl.BlockSpec((tm, tk), lambda i, k: (i, k)),       # A block
                    pl.BlockSpec((tk, LANES), lambda i, k: (k, 0)),    # Z block
                    pl.BlockSpec((1, LANES), lambda i, k: (0, 0)),     # bias
                    pl.BlockSpec((LANES, LANES), lambda i, k: (0, 0)), # W_post
                    pl.BlockSpec((1, LANES), lambda i, k: (0, 0)),     # b_post
                ],
                out_specs=pl.BlockSpec((tm, LANES), lambda i, k: (i, 0)),
                scratch_shapes=[pltpu.VMEM((tm, LANES), jnp.float32)]),
            compiler_params=pltpu.CompilerParams(
                dimension_semantics=("parallel", "arbitrary"),
                vmem_limit_bytes=48 * 1024 * 1024),
            cost_estimate=pl.CostEstimate(
                flops=2 * n_pad * n_pad * LANES + 2 * n_pad * LANES * LANES,
                transcendentals=0,
                bytes_accessed=n_pad * n_pad * 2 + rows * n_pad * LANES * 2
                               + LANES * LANES * 2 + out_bytes),
        )(a_pad, z, bias, w_post, b_post)

    # layer 1: H1 = relu(A_hat @ Z1 + b1); Z2 = H1 @ W2 fused into finalize
    z2 = agg_layer(z1, b1p, w2p, zero_bias, jnp.bfloat16)
    # layer 2 + fc: logits = relu(A_hat @ Z2 + b2) @ W3 + b3
    logits_pad = agg_layer(z2, b2p, w3p, b3p, jnp.float32)

    return logits_pad[:n, :out_dim]


def gcn_norm_dense(edge_index, num_nodes):
    """Dense D^-1/2 (A + I) D^-1/2, matching PyG gcn_norm semantics."""
    # TODO(synk): CSV load / StandardScaler / string-node -> index mapping from
    # the original script are host-side preprocessing, done synthetically here.
    src, dst = edge_index[0], edge_index[1]
    a = jnp.zeros((num_nodes, num_nodes), jnp.float32)
    a = a.at[dst, src].add(1.0)                    # A[target, source]
    a = a + jnp.eye(num_nodes, dtype=jnp.float32)  # self loops
    deg = a.sum(axis=1)
    d_inv_sqrt = jnp.where(deg > 0, 1.0 / jnp.sqrt(deg), 0.0)
    return d_inv_sqrt[:, None] * a * d_inv_sqrt[None, :]


if __name__ == "__main__":
    key = jax.random.PRNGKey(0)
    N = 64          # number of graph nodes (small synthetic size)
    F = 7           # ['step','type','amount',...] -> 7 feature columns
    E = 128         # number of edges

    keys = jax.random.split(key, 10)

    x = jax.random.normal(keys[0], (N, F), dtype=jnp.float32)
    src = jax.random.randint(keys[1], (E,), 0, N)
    dst = jax.random.randint(keys[2], (E,), 0, N)
    edge_index = jnp.stack([src, dst]).astype(jnp.int32)
    a_hat = gcn_norm_dense(edge_index, N)

    w1 = jax.random.normal(keys[3], (F, 32), dtype=jnp.float32) * 0.1   # conv1 W
    b1 = jax.random.normal(keys[4], (1, 32), dtype=jnp.float32) * 0.1   # conv1 b
    w2 = jax.random.normal(keys[5], (32, 16), dtype=jnp.float32) * 0.1  # conv2 W
    b2 = jax.random.normal(keys[6], (1, 16), dtype=jnp.float32) * 0.1   # conv2 b
    w3 = jax.random.normal(keys[7], (16, 2), dtype=jnp.float32) * 0.1   # fc W
    b3 = jax.random.normal(keys[8], (1, 2), dtype=jnp.float32) * 0.1    # fc b

    out = fraud_gcn_forward(a_hat, x, w1, b1, w2, b2, w3, b3)
    out = jax.block_until_ready(out)
    assert out.shape == (N, 2)

    # Reference 1: same bf16 quantization points as the kernel (tight check).
    bf = jnp.bfloat16
    a_bf = a_hat.astype(bf)
    z1_r = jnp.dot(x.astype(bf), w1.astype(bf),
                   preferred_element_type=jnp.float32).astype(bf)
    h1_r = jnp.maximum(jnp.dot(a_bf, z1_r, preferred_element_type=jnp.float32) + b1, 0.0)
    z2_r = jnp.dot(h1_r.astype(bf), w2.astype(bf),
                   preferred_element_type=jnp.float32).astype(bf)
    h2_r = jnp.maximum(jnp.dot(a_bf, z2_r, preferred_element_type=jnp.float32) + b2, 0.0)
    ref_bf = jnp.dot(h2_r.astype(bf), w3.astype(bf),
                     preferred_element_type=jnp.float32) + b3
    assert jnp.allclose(out, ref_bf, atol=5e-3, rtol=5e-3)

    # Reference 2: full f32 math (module semantics), loose tol for bf16 A/W.
    ref32 = jnp.maximum(a_hat @ (x @ w1) + b1, 0.0)
    ref32 = jnp.maximum(a_hat @ (ref32 @ w2) + b2, 0.0)
    ref32 = ref32 @ w3 + b3
    assert jnp.allclose(out, ref32, atol=5e-2)

    print("KERNEL_OK")
</pallas_src>

<mosaic_0001>
module attributes {stable_mosaic.version = 11 : i64} {
  func.func @_xw_kernel(%arg0: i32, %arg1: memref<128x8xf32, #tpu.memory_space<vmem>>, %arg2: memref<8x128xbf16, #tpu.memory_space<vmem>>, %arg3: memref<128x128xbf16, #tpu.memory_space<vmem>>) attributes {dimension_semantics = [#tpu.dimension_semantics<parallel>], iteration_bounds = array<i64: 1>, scalar_prefetch = 0 : i64, scratch_operands = 0 : i64, tpu.core_type = #tpu.core_type<tc>, window_params = [{transform_indices = @transform_0, window_bounds = array<i64: 128, 8>}, {pipeline_mode = #tpu.pipeline_mode<synchronous>, transform_indices = @transform_1, window_bounds = array<i64: 8, 128>}, {transform_indices = @transform_2, window_bounds = array<i64: 128, 128>}]} {
    %c0 = arith.constant 0 : index
    %c0_0 = arith.constant 0 : index
    %0 = vector.load %arg1[%c0, %c0_0] : memref<128x8xf32, #tpu.memory_space<vmem>>, vector<128x8xf32>
    %1 = arith.truncf %0 : vector<128x8xf32> to vector<128x8xbf16>
    %c0_1 = arith.constant 0 : index
    %c0_2 = arith.constant 0 : index
    %2 = vector.load %arg2[%c0_1, %c0_2] : memref<8x128xbf16, #tpu.memory_space<vmem>>, vector<8x128xbf16>
    %cst = arith.constant dense<0.000000e+00> : vector<128x128xf32>
    %3 = tpu.matmul %1, %2, %cst {dimension_numbers = #tpu.dot_dimension_numbers<[1], [0], [0], [1], [0, 0, 1, 1], [], []>} : vector<128x8xbf16>, vector<8x128xbf16>, vector<128x128xf32> -> vector<128x128xf32>
    %4 = arith.truncf %3 : vector<128x128xf32> to vector<128x128xbf16>
    %c0_3 = arith.constant 0 : index
    %c0_4 = arith.constant 0 : index
    %5 = vector.load %arg3[%c0_3, %c0_4] : memref<128x128xbf16, #tpu.memory_space<vmem>>, vector<128x128xbf16>
    tpu.vector_store %arg3[%c0_3, %c0_4], %4 {strides = array<i32>} : memref<128x128xbf16, #tpu.memory_space<vmem>>, vector<128x128xbf16>,
    return
  }
  func.func @transform_0(%arg0: i32) -> (i32, i32) {
    %c0_i32 = arith.constant 0 : i32
    %c0_i32_0 = arith.constant 0 : i32
    return %arg0, %c0_i32 : i32, i32
  }
  func.func @transform_1(%arg0: i32) -> (i32, i32) {
    %c0_i32 = arith.constant 0 : i32
    %c0_i32_0 = arith.constant 0 : i32
    %c0_i32_1 = arith.constant 0 : i32
    return %c0_i32, %c0_i32_0 : i32, i32
  }
  func.func @transform_2(%arg0: i32) -> (i32, i32) {
    %c0_i32 = arith.constant 0 : i32
    %c0_i32_0 = arith.constant 0 : i32
    return %arg0, %c0_i32 : i32, i32
  }
}

module attributes {stable_mosaic.version = 11 : i64} {
  func.func @_gcn_agg_kernel(%arg0: i32, %arg1: i32, %arg2: memref<128x128xbf16, #tpu.memory_space<vmem>>, %arg3: memref<128x128xbf16, #tpu.memory_space<vmem>>, %arg4: memref<1x128xf32, #tpu.memory_space<vmem>>, %arg5: memref<128x128xbf16, #tpu.memory_space<vmem>>, %arg6: memref<1x128xf32, #tpu.memory_space<vmem>>, %arg7: memref<128x128xbf16, #tpu.memory_space<vmem>>, %arg8: memref<128x128xf32, #tpu.memory_space<vmem>>) attributes {dimension_semantics = [#tpu.dimension_semantics<parallel>, #tpu.dimension_semantics<arbitrary>], iteration_bounds = array<i64: 1, 1>, scalar_prefetch = 0 : i64, scratch_operands = 1 : i64, tpu.core_type = #tpu.core_type<tc>, window_params = [{transform_indices = @transform_0, window_bounds = array<i64: 128, 128>}, {transform_indices = @transform_1, window_bounds = array<i64: 128, 128>}, {pipeline_mode = #tpu.pipeline_mode<synchronous>, transform_indices = @transform_2, window_bounds = array<i64: 1, 128>}, {pipeline_mode = #tpu.pipeline_mode<synchronous>, transform_indices = @transform_3, window_bounds = array<i64: 128, 128>}, {pipeline_mode = #tpu.pipeline_mode<synchronous>, transform_indices = @transform_4, window_bounds = array<i64: 1, 128>}, {transform_indices = @transform_5, window_bounds = array<i64: 128, 128>}]} {
    %c0_i32 = arith.constant 0 : i32
    %0 = arith.cmpi eq, %arg1, %c0_i32 : i32
    %1 = arith.extui %0 : i1 to i32
    %c0_i32_0 = arith.constant 0 : i32
    %2 = arith.cmpi ne, %1, %c0_i32_0 : i32
    scf.if %2 {
      %cst_10 = arith.constant 0.000000e+00 : f32
      %12 = vector.broadcast %cst_10 : f32 to vector<128x128xf32>
      %c0_11 = arith.constant 0 : index
      %c0_12 = arith.constant 0 : index
      %13 = vector.load %arg8[%c0_11, %c0_12] : memref<128x128xf32, #tpu.memory_space<vmem>>, vector<128x128xf32>
      tpu.vector_store %arg8[%c0_11, %c0_12], %12 {strides = array<i32>} : memref<128x128xf32, #tpu.memory_space<vmem>>, vector<128x128xf32>,
    } else {
    }
    %c0 = arith.constant 0 : index
    %c0_1 = arith.constant 0 : index
    %3 = vector.load %arg8[%c0, %c0_1] : memref<128x128xf32, #tpu.memory_space<vmem>>, vector<128x128xf32>
    %c0_2 = arith.constant 0 : index
    %c0_3 = arith.constant 0 : index
    %4 = vector.load %arg2[%c0_2, %c0_3] : memref<128x128xbf16, #tpu.memory_space<vmem>>, vector<128x128xbf16>
    %c0_4 = arith.constant 0 : index
    %c0_5 = arith.constant 0 : index
    %5 = vector.load %arg3[%c0_4, %c0_5] : memref<128x128xbf16, #tpu.memory_space<vmem>>, vector<128x128xbf16>
    %cst = arith.constant dense<0.000000e+00> : vector<128x128xf32>
    %6 = tpu.matmul %4, %5, %cst {dimension_numbers = #tpu.dot_dimension_numbers<[1], [0], [0], [1], [0, 0, 1, 1], [], []>} : vector<128x128xbf16>, vector<128x128xbf16>, vector<128x128xf32> -> vector<128x128xf32>
    %7 = arith.addf %3, %6 : vector<128x128xf32>
    %c0_6 = arith.constant 0 : index
    %c0_7 = arith.constant 0 : index
    %8 = vector.load %arg8[%c0_6, %c0_7] : memref<128x128xf32, #tpu.memory_space<vmem>>, vector<128x128xf32>
    tpu.vector_store %arg8[%c0_6, %c0_7], %7 {strides = array<i32>} : memref<128x128xf32, #tpu.memory_space<vmem>>, vector<128x128xf32>,
    %c0_i32_8 = arith.constant 0 : i32
    %9 = arith.cmpi eq, %arg1, %c0_i32_8 : i32
    %10 = arith.extui %9 : i1 to i32
    %c0_i32_9 = arith.constant 0 : i32
    %11 = arith.cmpi ne, %10, %c0_i32_9 : i32
    scf.if %11 {
      %c0_10 = arith.constant 0 : index
      %c0_11 = arith.constant 0 : index
      %12 = vector.load %arg8[%c0_10, %c0_11] : memref<128x128xf32, #tpu.memory_space<vmem>>, vector<128x128xf32>
      %c0_12 = arith.constant 0 : index
      %c0_13 = arith.constant 0 : index
      %13 = vector.load %arg4[%c0_12, %c0_13] : memref<1x128xf32, #tpu.memory_space<vmem>>, vector<1x128xf32>
      %14 = vector.broadcast %13 : vector<1x128xf32> to vector<128x128xf32>
      %15 = arith.addf %12, %14 : vector<128x128xf32>
      %cst_14 = arith.constant 0.000000e+00 : f32
      %16 = vector.broadcast %cst_14 : f32 to vector<128x128xf32>
      %17 = arith.maximumf %15, %16 : vector<128x128xf32>
      %18 = arith.truncf %17 : vector<128x128xf32> to vector<128x128xbf16>
      %c0_15 = arith.constant 0 : index
      %c0_16 = arith.constant 0 : index
      %19 = vector.load %arg5[%c0_15, %c0_16] : memref<128x128xbf16, #tpu.memory_space<vmem>>, vector<128x128xbf16>
      %cst_17 = arith.constant dense<0.000000e+00> : vector<128x128xf32>
      %20 = tpu.matmul %18, %19, %cst_17 {dimension_numbers = #tpu.dot_dimension_numbers<[1], [0], [0], [1], [0, 0, 1, 1], [], []>} : vector<128x128xbf16>, vector<128x128xbf16>, vector<128x128xf32> -> vector<128x128xf32>
      %c0_18 = arith.constant 0 : index
      %c0_19 = arith.constant 0 : index
      %21 = vector.load %arg6[%c0_18, %c0_19] : memref<1x128xf32, #tpu.memory_space<vmem>>, vector<1x128xf32>
      %22 = vector.broadcast %21 : vector<1x128xf32> to vector<128x128xf32>
      %23 = arith.addf %20, %22 : vector<128x128xf32>
      %24 = arith.truncf %23 : vector<128x128xf32> to vector<128x128xbf16>
      %c0_20 = arith.constant 0 : index
      %c0_21 = arith.constant 0 : index
      %25 = vector.load %arg7[%c0_20, %c0_21] : memref<128x128xbf16, #tpu.memory_space<vmem>>, vector<128x128xbf16>
      tpu.vector_store %arg7[%c0_20, %c0_21], %24 {strides = array<i32>} : memref<128x128xbf16, #tpu.memory_space<vmem>>, vector<128x128xbf16>,
    } else {
    }
    return
  }
  func.func @transform_0(%arg0: i32, %arg1: i32) -> (i32, i32) {
    %c0_i32 = arith.constant 0 : i32
    return %arg0, %arg1 : i32, i32
  }
  func.func @transform_1(%arg0: i32, %arg1: i32) -> (i32, i32) {
    %c0_i32 = arith.constant 0 : i32
    %c0_i32_0 = arith.constant 0 : i32
    return %arg1, %c0_i32 : i32, i32
  }
  func.func @transform_2(%arg0: i32, %arg1: i32) -> (i32, i32) {
    %c0_i32 = arith.constant 0 : i32
    %c0_i32_0 = arith.constant 0 : i32
    %c0_i32_1 = arith.constant 0 : i32
    return %c0_i32, %c0_i32_0 : i32, i32
  }
  func.func @transform_3(%arg0: i32, %arg1: i32) -> (i32, i32) {
    %c0_i32 = arith.constant 0 : i32
    %c0_i32_0 = arith.constant 0 : i32
    %c0_i32_1 = arith.constant 0 : i32
    return %c0_i32, %c0_i32_0 : i32, i32
  }
  func.func @transform_4(%arg0: i32, %arg1: i32) -> (i32, i32) {
    %c0_i32 = arith.constant 0 : i32
    %c0_i32_0 = arith.constant 0 : i32
    %c0_i32_1 = arith.constant 0 : i32
    return %c0_i32, %c0_i32_0 : i32, i32
  }
  func.func @transform_5(%arg0: i32, %arg1: i32) -> (i32, i32) {
    %c0_i32 = arith.constant 0 : i32
    %c0_i32_0 = arith.constant 0 : i32
    return %arg0, %c0_i32 : i32, i32
  }
}

module attributes {stable_mosaic.version = 11 : i64} {
  func.func @_gcn_agg_kernel(%arg0: i32, %arg1: i32, %arg2: memref<128x128xbf16, #tpu.memory_space<vmem>>, %arg3: memref<128x128xbf16, #tpu.memory_space<vmem>>, %arg4: memref<1x128xf32, #tpu.memory_space<vmem>>, %arg5: memref<128x128xbf16, #tpu.memory_space<vmem>>, %arg6: memref<1x128xf32, #tpu.memory_space<vmem>>, %arg7: memref<128x128xf32, #tpu.memory_space<vmem>>, %arg8: memref<128x128xf32, #tpu.memory_space<vmem>>) attributes {dimension_semantics = [#tpu.dimension_semantics<parallel>, #tpu.dimension_semantics<arbitrary>], iteration_bounds = array<i64: 1, 1>, scalar_prefetch = 0 : i64, scratch_operands = 1 : i64, tpu.core_type = #tpu.core_type<tc>, window_params = [{transform_indices = @transform_0, window_bounds = array<i64: 128, 128>}, {transform_indices = @transform_1, window_bounds = array<i64: 128, 128>}, {pipeline_mode = #tpu.pipeline_mode<synchronous>, transform_indices = @transform_2, window_bounds = array<i64: 1, 128>}, {pipeline_mode = #tpu.pipeline_mode<synchronous>, transform_indices = @transform_3, window_bounds = array<i64: 128, 128>}, {pipeline_mode = #tpu.pipeline_mode<synchronous>, transform_indices = @transform_4, window_bounds = array<i64: 1, 128>}, {transform_indices = @transform_5, window_bounds = array<i64: 128, 128>}]} {
    %c0_i32 = arith.constant 0 : i32
    %0 = arith.cmpi eq, %arg1, %c0_i32 : i32
    %1 = arith.extui %0 : i1 to i32
    %c0_i32_0 = arith.constant 0 : i32
    %2 = arith.cmpi ne, %1, %c0_i32_0 : i32
    scf.if %2 {
      %cst_10 = arith.constant 0.000000e+00 : f32
      %12 = vector.broadcast %cst_10 : f32 to vector<128x128xf32>
      %c0_11 = arith.constant 0 : index
      %c0_12 = arith.constant 0 : index
      %13 = vector.load %arg8[%c0_11, %c0_12] : memref<128x128xf32, #tpu.memory_space<vmem>>, vector<128x128xf32>
      tpu.vector_store %arg8[%c0_11, %c0_12], %12 {strides = array<i32>} : memref<128x128xf32, #tpu.memory_space<vmem>>, vector<128x128xf32>,
    } else {
    }
    %c0 = arith.constant 0 : index
    %c0_1 = arith.constant 0 : index
    %3 = vector.load %arg8[%c0, %c0_1] : memref<128x128xf32, #tpu.memory_space<vmem>>, vector<128x128xf32>
    %c0_2 = arith.constant 0 : index
    %c0_3 = arith.constant 0 : index
    %4 = vector.load %arg2[%c0_2, %c0_3] : memref<128x128xbf16, #tpu.memory_space<vmem>>, vector<128x128xbf16>
    %c0_4 = arith.constant 0 : index
    %c0_5 = arith.constant 0 : index
    %5 = vector.load %arg3[%c0_4, %c0_5] : memref<128x128xbf16, #tpu.memory_space<vmem>>, vector<128x128xbf16>
    %cst = arith.constant dense<0.000000e+00> : vector<128x128xf32>
    %6 = tpu.matmul %4, %5, %cst {dimension_numbers = #tpu.dot_dimension_numbers<[1], [0], [0], [1], [0, 0, 1, 1], [], []>} : vector<128x128xbf16>, vector<128x128xbf16>, vector<128x128xf32> -> vector<128x128xf32>
    %7 = arith.addf %3, %6 : vector<128x128xf32>
    %c0_6 = arith.constant 0 : index
    %c0_7 = arith.constant 0 : index
    %8 = vector.load %arg8[%c0_6, %c0_7] : memref<128x128xf32, #tpu.memory_space<vmem>>, vector<128x128xf32>
    tpu.vector_store %arg8[%c0_6, %c0_7], %7 {strides = array<i32>} : memref<128x128xf32, #tpu.memory_space<vmem>>, vector<128x128xf32>,
    %c0_i32_8 = arith.constant 0 : i32
    %9 = arith.cmpi eq, %arg1, %c0_i32_8 : i32
    %10 = arith.extui %9 : i1 to i32
    %c0_i32_9 = arith.constant 0 : i32
    %11 = arith.cmpi ne, %10, %c0_i32_9 : i32
    scf.if %11 {
      %c0_10 = arith.constant 0 : index
      %c0_11 = arith.constant 0 : index
      %12 = vector.load %arg8[%c0_10, %c0_11] : memref<128x128xf32, #tpu.memory_space<vmem>>, vector<128x128xf32>
      %c0_12 = arith.constant 0 : index
      %c0_13 = arith.constant 0 : index
      %13 = vector.load %arg4[%c0_12, %c0_13] : memref<1x128xf32, #tpu.memory_space<vmem>>, vector<1x128xf32>
      %14 = vector.broadcast %13 : vector<1x128xf32> to vector<128x128xf32>
      %15 = arith.addf %12, %14 : vector<128x128xf32>
      %cst_14 = arith.constant 0.000000e+00 : f32
      %16 = vector.broadcast %cst_14 : f32 to vector<128x128xf32>
      %17 = arith.maximumf %15, %16 : vector<128x128xf32>
      %18 = arith.truncf %17 : vector<128x128xf32> to vector<128x128xbf16>
      %c0_15 = arith.constant 0 : index
      %c0_16 = arith.constant 0 : index
      %19 = vector.load %arg5[%c0_15, %c0_16] : memref<128x128xbf16, #tpu.memory_space<vmem>>, vector<128x128xbf16>
      %cst_17 = arith.constant dense<0.000000e+00> : vector<128x128xf32>
      %20 = tpu.matmul %18, %19, %cst_17 {dimension_numbers = #tpu.dot_dimension_numbers<[1], [0], [0], [1], [0, 0, 1, 1], [], []>} : vector<128x128xbf16>, vector<128x128xbf16>, vector<128x128xf32> -> vector<128x128xf32>
      %c0_18 = arith.constant 0 : index
      %c0_19 = arith.constant 0 : index
      %21 = vector.load %arg6[%c0_18, %c0_19] : memref<1x128xf32, #tpu.memory_space<vmem>>, vector<1x128xf32>
      %22 = vector.broadcast %21 : vector<1x128xf32> to vector<128x128xf32>
      %23 = arith.addf %20, %22 : vector<128x128xf32>
      %c0_20 = arith.constant 0 : index
      %c0_21 = arith.constant 0 : index
      %24 = vector.load %arg7[%c0_20, %c0_21] : memref<128x128xf32, #tpu.memory_space<vmem>>, vector<128x128xf32>
      tpu.vector_store %arg7[%c0_20, %c0_21], %23 {strides = array<i32>} : memref<128x128xf32, #tpu.memory_space<vmem>>, vector<128x128xf32>,
    } else {
    }
    return
  }
  func.func @transform_0(%arg0: i32, %arg1: i32) -> (i32, i32) {
    %c0_i32 = arith.constant 0 : i32
    return %arg0, %arg1 : i32, i32
  }
  func.func @transform_1(%arg0: i32, %arg1: i32) -> (i32, i32) {
    %c0_i32 = arith.constant 0 : i32
    %c0_i32_0 = arith.constant 0 : i32
    return %arg1, %c0_i32 : i32, i32
  }
  func.func @transform_2(%arg0: i32, %arg1: i32) -> (i32, i32) {
    %c0_i32 = arith.constant 0 : i32
    %c0_i32_0 = arith.constant 0 : i32
    %c0_i32_1 = arith.constant 0 : i32
    return %c0_i32, %c0_i32_0 : i32, i32
  }
  func.func @transform_3(%arg0: i32, %arg1: i32) -> (i32, i32) {
    %c0_i32 = arith.constant 0 : i32
    %c0_i32_0 = arith.constant 0 : i32
    %c0_i32_1 = arith.constant 0 : i32
    return %c0_i32, %c0_i32_0 : i32, i32
  }
  func.func @transform_4(%arg0: i32, %arg1: i32) -> (i32, i32) {
    %c0_i32 = arith.constant 0 : i32
    %c0_i32_0 = arith.constant 0 : i32
    %c0_i32_1 = arith.constant 0 : i32
    return %c0_i32, %c0_i32_0 : i32, i32
  }
  func.func @transform_5(%arg0: i32, %arg1: i32) -> (i32, i32) {
    %c0_i32 = arith.constant 0 : i32
    %c0_i32_0 = arith.constant 0 : i32
    return %arg0, %c0_i32 : i32, i32
  }
}

</mosaic_0001>

<llo_original>
// kernel: fraud_gcn_forward.3
$region0: #{fraud_gcn_forward.3}
  #allocation0 [shape = 'u32[]', space=smem, size = 0x4, offset = 0x4, fixed_abs, tag = 'smem constant byte address 0x4 - core index']
  #allocation1 [shape = 'u32[72,128]{1,0:T(1,128)}', space=vmem, size = 0x9000, scoped, tag = 'internal scratch']
  %s0 = inlined_call_operand.vmem [shape: f32[128,8], index: 0, kind: input, shape index: {}]
  %s1 = inlined_call_operand.vmem [shape: bf16[8,128], index: 1, kind: input, shape index: {}]
  %s2 = inlined_call_operand.vmem [shape: bf16[128,128], index: 2, kind: output, shape index: {}]
  %s3 = sld [smem:[#allocation0]]
  $region18: #{fraud_gcn_forward.3} parent=0
    _
  %s5 = ssub.s32 1, %s3
  %s6 = scalar_select 0, %s5, %s3
  // Predicated region
  $region2: #{fraud_gcn_forward.3} parent=0 // pred_check
    _
  $region3: #{fraud_gcn_forward.3} parent=0 // pred_check_branch
    %8 = sbr.rel (0) target = $region5
  $region4: #{fraud_gcn_forward.3} parent=0 // pred_region
    _
  $region5: #{fraud_gcn_forward.3} parent=0 // pred_fallthru
    _
  // Predicated region
  $region6: #{fraud_gcn_forward.3} parent=0 // pred_check
    _
  $region7: #{fraud_gcn_forward.3} parent=0 // pred_check_branch
    %10 = sbr.rel (0) target = $region9
  $region8: #{fraud_gcn_forward.3} parent=0 // pred_region
    _
  $region9: #{fraud_gcn_forward.3} parent=0 // pred_fallthru
    _
  %v12 = vld [vmem:[%s0] sm:$0xff]
  %v13 = vld [vmem:[%s0 + $0x8] sm:$0xff]
  %v14 = vld [vmem:[%s0 + $0x10] sm:$0xff]
  %v15 = vld [vmem:[%s0 + $0x18] sm:$0xff]
  %v16 = vld [vmem:[%s0 + $0x20] sm:$0xff]
  %v17 = vld [vmem:[%s0 + $0x28] sm:$0xff]
  %v18 = vld [vmem:[%s0 + $0x30] sm:$0xff]
  %v19 = vld [vmem:[%s0 + $0x38] sm:$0xff]
  %v20 = vld [vmem:[%s0 + $0x40] sm:$0xff]
  %v21 = vld [vmem:[%s0 + $0x48] sm:$0xff]
  %v22 = vld [vmem:[%s0 + $0x50] sm:$0xff]
  %v23 = vld [vmem:[%s0 + $0x58] sm:$0xff]
  %v24 = vld [vmem:[%s0 + $0x60] sm:$0xff]
  %v25 = vld [vmem:[%s0 + $0x68] sm:$0xff]
  %v26 = vld [vmem:[%s0 + $0x70] sm:$0xff]
  %v27 = vld [vmem:[%s0 + $0x78] sm:$0xff]
  %v28 = vpack.c.bf16 %v13, %v12
  %v29 = vpack.c.bf16 %v15, %v14
  %v30 = vpack.c.bf16 %v17, %v16
  %v31 = vpack.c.bf16 %v19, %v18
  %v32 = vpack.c.bf16 %v21, %v20
  %v33 = vpack.c.bf16 %v23, %v22
  %v34 = vpack.c.bf16 %v25, %v24
  %v35 = vpack.c.bf16 %v27, %v26
  %v36 = vld [vmem:[%s1] sm:$0xf]
  %vm37 = vcmask 64512
  %v39 = vsel %vm37, %v28, 0
  %v42 = vsel %vm37, %v29, 0
  %v45 = vsel %vm37, %v30, 0
  %v48 = vsel %vm37, %v31, 0
  %v51 = vsel %vm37, %v32, 0
  %v54 = vsel %vm37, %v33, 0
  %v57 = vsel %vm37, %v34, 0
  %v60 = vsel %vm37, %v35, 0
  %vm62 = vcmask 1043456
  %v64 = vsel %vm62, %v36, 0
  %66 = vmatpush.bf16.msra.mxu0 0
  %67 = vmatpush.bf16.msra.mxu0 0
  %68 = vmatpush.bf16.msra.mxu0 0
  %69 = vmatpush.bf16.msra.mxu0 0
  %70 = vmatpush.bf16.msra.mxu0 0
  %71 = vmatpush.bf16.msra.mxu0 0
  %72 = vmatpush.bf16.msra.mxu0 0
  %73 = vmatpush.bf16.msra.mxu0 %v64
  %74 = vmatmul.bf16.gmra.mxu0 %v39
  %v75 = vpop.f32.mrf.mxu0
  %v76 = vadd.f32 0.0, %v75
  %v77 = vpop.f32.mrf.mxu0
  %v78 = vadd.f32 0.0, %v77
  %79 = vmatmul.bf16.gmra.mxu0 %v42
  %v80 = vpop.f32.mrf.mxu0
  %v81 = vadd.f32 0.0, %v80
  %v82 = vpop.f32.mrf.mxu0
  %v83 = vadd.f32 0.0, %v82
  %84 = vmatmul.bf16.gmra.mxu0 %v45
  %v85 = vpop.f32.mrf.mxu0
  %v86 = vadd.f32 0.0, %v85
  %v87 = vpop.f32.mrf.mxu0
  %v88 = vadd.f32 0.0, %v87
  %89 = vmatmul.bf16.gmra.mxu0 %v48
  %v90 = vpop.f32.mrf.mxu0
  %v91 = vadd.f32 0.0, %v90
  %v92 = vpop.f32.mrf.mxu0
  %v93 = vadd.f32 0.0, %v92
  %94 = vmatmul.bf16.gmra.mxu0 %v51
  %v95 = vpop.f32.mrf.mxu0
  %v96 = vadd.f32 0.0, %v95
  %v97 = vpop.f32.mrf.mxu0
  %v98 = vadd.f32 0.0, %v97
  %99 = vmatmul.bf16.gmra.mxu0 %v54
  %v100 = vpop.f32.mrf.mxu0
  %v101 = vadd.f32 0.0, %v100
  %v102 = vpop.f32.mrf.mxu0
  %v103 = vadd.f32 0.0, %v102
  %104 = vmatmul.bf16.gmra.mxu0 %v57
  %v105 = vpop.f32.mrf.mxu0
  %v106 = vadd.f32 0.0, %v105
  %v107 = vpop.f32.mrf.mxu0
  %v108 = vadd.f32 0.0, %v107
  %109 = vmatmul.bf16.gmra.mxu0 %v60
  %v110 = vpop.f32.mrf.mxu0
  %v111 = vadd.f32 0.0, %v110
  %v112 = vpop.f32.mrf.mxu0
  %v113 = vadd.f32 0.0, %v112
  %114 = vdwg.mxu0
  %v115 = vpack.c.bf16 %v76, %v76
  %v116 = vpack.c.bf16 %v78, %v78
  %v117 = vpack.c.bf16 %v81, %v81
  %v118 = vpack.c.bf16 %v83, %v83
  %v119 = vpack.c.bf16 %v86, %v86
  %v120 = vpack.c.bf16 %v88, %v88
  %v121 = vpack.c.bf16 %v91, %v91
  %v122 = vpack.c.bf16 %v93, %v93
  %v123 = vpack.c.bf16 %v96, %v96
  %v124 = vpack.c.bf16 %v98, %v98
  %v125 = vpack.c.bf16 %v101, %v101
  %v126 = vpack.c.bf16 %v103, %v103
  %v127 = vpack.c.bf16 %v106, %v106
  %v128 = vpack.c.bf16 %v108, %v108
  %v129 = vpack.c.bf16 %v111, %v111
  %v130 = vpack.c.bf16 %v113, %v113
  %131 = vst [vmem:[%s2] sm:$0xf] %v115
  %132 = vst [vmem:[%s2 + $0x4] sm:$0xf] %v116
  %133 = vst [vmem:[%s2 + $0x8] sm:$0xf] %v117
  %134 = vst [vmem:[%s2 + $0xc] sm:$0xf] %v118
  %135 = vst [vmem:[%s2 + $0x10] sm:$0xf] %v119
  %136 = vst [vmem:[%s2 + $0x14] sm:$0xf] %v120
  %137 = vst [vmem:[%s2 + $0x18] sm:$0xf] %v121
  %138 = vst [vmem:[%s2 + $0x1c] sm:$0xf] %v122
  %139 = vst [vmem:[%s2 + $0x20] sm:$0xf] %v123
  %140 = vst [vmem:[%s2 + $0x24] sm:$0xf] %v124
  %141 = vst [vmem:[%s2 + $0x28] sm:$0xf] %v125
  %142 = vst [vmem:[%s2 + $0x2c] sm:$0xf] %v126
  %143 = vst [vmem:[%s2 + $0x30] sm:$0xf] %v127
  %144 = vst [vmem:[%s2 + $0x34] sm:$0xf] %v128
  %145 = vst [vmem:[%s2 + $0x38] sm:$0xf] %v129
  %146 = vst [vmem:[%s2 + $0x3c] sm:$0xf] %v130
  // Predicated region
  $region10: #{fraud_gcn_forward.3} parent=0 // pred_check
    _
  $region11: #{fraud_gcn_forward.3} parent=0 // pred_check_branch
    %148 = sbr.rel (0) target = $region13
  $region12: #{fraud_gcn_forward.3} parent=0 // pred_region
    _
  $region13: #{fraud_gcn_forward.3} parent=0 // pred_fallthru
    _
  // Predicated region
  $region14: #{fraud_gcn_forward.3} parent=0 // pred_check
    _
  $region15: #{fraud_gcn_forward.3} parent=0 // pred_check_branch
    %150 = sbr.rel (0) target = $region17
  $region16: #{fraud_gcn_forward.3} parent=0 // pred_region
    _
  $region17: #{fraud_gcn_forward.3} parent=0 // pred_fallthru
    _

// kernel: fraud_gcn_forward.4
$region0: #{fraud_gcn_forward.4}
  #allocation0 [shape = 'u32[]', space=smem, size = 0x4, offset = 0x4, fixed_abs, tag = 'smem constant byte address 0x4 - core index']
  #allocation1 [shape = 'u32[72,128]{1,0:T(1,128)}', space=vmem, size = 0x9000, scoped, tag = 'internal scratch']
  #allocation2 [shape = 'f32[128,128]{1,0:T(8,128)}', space=vmem, size = 0x10000, scoped, tag = 'scratch operand']
  %s0 = inlined_call_operand.vmem [shape: bf16[128,128], index: 0, kind: input, shape index: {}]
  %s1 = inlined_call_operand.vmem [shape: bf16[128,128], index: 1, kind: input, shape index: {}]
  %s2 = inlined_call_operand.vmem [shape: f32[1,128], index: 2, kind: input, shape index: {}]
  %s3 = inlined_call_operand.vmem [shape: bf16[128,128], index: 3, kind: input, shape index: {}]
  %s4 = inlined_call_operand.vmem [shape: f32[1,128], index: 4, kind: input, shape index: {}]
  %s5 = inlined_call_operand.vmem [shape: bf16[128,128], index: 5, kind: output, shape index: {}]
  %s6 = sld [smem:[#allocation0]]
  $region38: #{fraud_gcn_forward.4} parent=0
    _
  %s8 = ssub.s32 1, %s6
  %s9 = scalar_select 0, %s8, %s6
  // Predicated region
  $region2: #{fraud_gcn_forward.4} parent=0 // pred_check
    _
  $region3: #{fraud_gcn_forward.4} parent=0 // pred_check_branch
    %11 = sbr.rel (0) target = $region5
  $region4: #{fraud_gcn_forward.4} parent=0 // pred_region
    _
  $region5: #{fraud_gcn_forward.4} parent=0 // pred_fallthru
    _
  // Predicated region
  $region6: #{fraud_gcn_forward.4} parent=0 // pred_check
    _
  $region7: #{fraud_gcn_forward.4} parent=0 // pred_check_branch
    %13 = sbr.rel (0) target = $region9
  $region8: #{fraud_gcn_forward.4} parent=0 // pred_region
    _
  $region9: #{fraud_gcn_forward.4} parent=0 // pred_fallthru
    _
  // Predicated region
  $region10: #{fraud_gcn_forward.4} parent=0 // pred_check
    _
  $region11: #{fraud_gcn_forward.4} parent=0 // pred_check_branch
    %15 = sbr.rel (0) target = $region13
  $region12: #{fraud_gcn_forward.4} parent=0 // pred_region
    _
  $region13: #{fraud_gcn_forward.4} parent=0 // pred_fallthru
    _
  // Predicated region
  $region14: #{fraud_gcn_forward.4} parent=0 // pred_check
    _
  $region15: #{fraud_gcn_forward.4} parent=0 // pred_check_branch
    %17 = sbr.rel (0) target = $region17
  $region16: #{fraud_gcn_forward.4} parent=0 // pred_region
    _
  $region17: #{fraud_gcn_forward.4} parent=0 // pred_fallthru
    _
  // Predicated region
  $region18: #{fraud_gcn_forward.4} parent=0 // pred_check
    _
  $region19: #{fraud_gcn_forward.4} parent=0 // pred_check_branch
    %19 = sbr.rel (0) target = $region21
  $region20: #{fraud_gcn_forward.4} parent=0 // pred_region
    _
  $region21: #{fraud_gcn_forward.4} parent=0 // pred_fallthru
    _
  %p20 = scmp.eq.s32.totalorder 0, 0
  // Predicated region
  $region22: #{fraud_gcn_forward.4} parent=0 // pred_check
    %p21 = pneg %p20
  $region23: #{fraud_gcn_forward.4} parent=0 // pred_check_branch
    %23 = sbr.rel (%p21) target = $region25
  $region24: #{fraud_gcn_forward.4} parent=0 // pred_region
    %24 = vst [vmem:[#allocation2] sm:$0xff] 0.0
    %25 = vst [vmem:[#allocation2 + $0x8] sm:$0xff] 0.0
    %26 = vst [vmem:[#allocation2 + $0x10] sm:$0xff] 0.0
    %27 = vst [vmem:[#allocation2 + $0x18] sm:$0xff] 0.0
    %28 = vst [vmem:[#allocation2 + $0x20] sm:$0xff] 0.0
    %29 = vst [vmem:[#allocation2 + $0x28] sm:$0xff] 0.0
    %30 = vst [vmem:[#allocation2 + $0x30] sm:$0xff] 0.0
    %31 = vst [vmem:[#allocation2 + $0x38] sm:$0xff] 0.0
    %32 = vst [vmem:[#allocation2 + $0x40] sm:$0xff] 0.0
    %33 = vst [vmem:[#allocation2 + $0x48] sm:$0xff] 0.0
    %34 = vst [vmem:[#allocation2 + $0x50] sm:$0xff] 0.0
    %35 = vst [vmem:[#allocation2 + $0x58] sm:$0xff] 0.0
    %36 = vst [vmem:[#allocation2 + $0x60] sm:$0xff] 0.0
    %37 = vst [vmem:[#allocation2 + $0x68] sm:$0xff] 0.0
    %38 = vst [vmem:[#allocation2 + $0x70] sm:$0xff] 0.0
    %39 = vst [vmem:[#allocation2 + $0x78] sm:$0xff] 0.0
  $region25: #{fraud_gcn_forward.4} parent=0 // pred_fallthru
    _
  %v40 = vld [vmem:[#allocation2] sm:$0xff]
  %v41 = vld [vmem:[#allocation2 + $0x8] sm:$0xff]
  %v42 = vld [vmem:[#allocation2 + $0x10] sm:$0xff]
  %v43 = vld [vmem:[#allocation2 + $0x18] sm:$0xff]
  %v44 = vld [vmem:[#allocation2 + $0x20] sm:$0xff]
  %v45 = vld [vmem:[#allocation2 + $0x28] sm:$0xff]
  %v46 = vld [vmem:[#allocation2 + $0x30] sm:$0xff]
  %v47 = vld [vmem:[#allocation2 + $0x38] sm:$0xff]
  %v48 = vld [vmem:[#allocation2 + $0x40] sm:$0xff]
  %v49 = vld [vmem:[#allocation2 + $0x48] sm:$0xff]
  %v50 = vld [vmem:[#allocation2 + $0x50] sm:$0xff]
  %v51 = vld [vmem:[#allocation2 + $0x58] sm:$0xff]
  %v52 = vld [vmem:[#allocation2 + $0x60] sm:$0xff]
  %v53 = vld [vmem:[#allocation2 + $0x68] sm:$0xff]
  %v54 = vld [vmem:[#allocation2 + $0x70] sm:$0xff]
  %v55 = vld [vmem:[#allocation2 + $0x78] sm:$0xff]
  %v56 = vld [vmem:[%s0] sm:$0xf]
  %v57 = vld [vmem:[%s0 + $0x4] sm:$0xf]
  %v58 = vld [vmem:[%s0 + $0x8] sm:$0xf]
  %v59 = vld [vmem:[%s0 + $0xc] sm:$0xf]
  %v60 = vld [vmem:[%s0 + $0x10] sm:$0xf]
  %v61 = vld [vmem:[%s0 + $0x14] sm:$0xf]
  %v62 = vld [vmem:[%s0 + $0x18] sm:$0xf]
  %v63 = vld [vmem:[%s0 + $0x1c] sm:$0xf]
  %v64 = vld [vmem:[%s0 + $0x20] sm:$0xf]
  %v65 = vld [vmem:[%s0 + $0x24] sm:$0xf]
  %v66 = vld [vmem:[%s0 + $0x28] sm:$0xf]
  %v67 = vld [vmem:[%s0 + $0x2c] sm:$0xf]
  %v68 = vld [vmem:[%s0 + $0x30] sm:$0xf]
  %v69 = vld [vmem:[%s0 + $0x34] sm:$0xf]
  %v70 = vld [vmem:[%s0 + $0x38] sm:$0xf]
  %v71 = vld [vmem:[%s0 + $0x3c] sm:$0xf]
  %v72 = vld [vmem:[%s1] sm:$0xf]
  %v73 = vld [vmem:[%s1 + $0x4] sm:$0xf]
  %v74 = vld [vmem:[%s1 + $0x8] sm:$0xf]
  %v75 = vld [vmem:[%s1 + $0xc] sm:$0xf]
  %v76 = vld [vmem:[%s1 + $0x10] sm:$0xf]
  %v77 = vld [vmem:[%s1 + $0x14] sm:$0xf]
  %v78 = vld [vmem:[%s1 + $0x18] sm:$0xf]
  %v79 = vld [vmem:[%s1 + $0x1c] sm:$0xf]
  %v80 = vld [vmem:[%s1 + $0x20] sm:$0xf]
  %v81 = vld [vmem:[%s1 + $0x24] sm:$0xf]
  %v82 = vld [vmem:[%s1 + $0x28] sm:$0xf]
  %v83 = vld [vmem:[%s1 + $0x2c] sm:$0xf]
  %v84 = vld [vmem:[%s1 + $0x30] sm:$0xf]
  %v85 = vld [vmem:[%s1 + $0x34] sm:$0xf]
  %v86 = vld [vmem:[%s1 + $0x38] sm:$0xf]
  %v87 = vld [vmem:[%s1 + $0x3c] sm:$0xf]
  %v104 = vunpack.c.l.b16 %v56
  %v105 = vunpack.c.l.b16 %v57
  %v106 = vunpack.c.l.b16 %v58
  %v107 = vunpack.c.l.b16 %v59
  %v108 = vunpack.c.l.b16 %v60
  %v109 = vunpack.c.l.b16 %v61
  %v110 = vunpack.c.l.b16 %v62
  %v111 = vunpack.c.l.b16 %v63
  %v112 = vunpack.c.l.b16 %v64
  %v113 = vunpack.c.l.b16 %v65
  %v114 = vunpack.c.l.b16 %v66
  %v115 = vunpack.c.l.b16 %v67
  %v116 = vunpack.c.l.b16 %v68
  %v117 = vunpack.c.l.b16 %v69
  %v118 = vunpack.c.l.b16 %v70
  %v119 = vunpack.c.l.b16 %v71
  %v120 = vpack.c.b16 %v105, %v104
  %v121 = vpack.c.b16 %v107, %v106
  %v122 = vpack.c.b16 %v109, %v108
  %v123 = vpack.c.b16 %v111, %v110
  %v124 = vpack.c.b16 %v113, %v112
  %v125 = vpack.c.b16 %v115, %v114
  %v126 = vpack.c.b16 %v117, %v116
  %v127 = vpack.c.b16 %v119, %v118
  %v152 = vunpack.c.l.b16 %v72
  %v153 = vunpack.c.l.b16 %v73
  %v154 = vunpack.c.l.b16 %v74
  %v155 = vunpack.c.l.b16 %v75
  %v156 = vunpack.c.l.b16 %v76
  %v157 = vunpack.c.l.b16 %v77
  %v158 = vunpack.c.l.b16 %v78
  %v159 = vunpack.c.l.b16 %v79
  %v160 = vunpack.c.l.b16 %v80
  %v161 = vunpack.c.l.b16 %v81
  %v162 = vunpack.c.l.b16 %v82
  %v163 = vunpack.c.l.b16 %v83
  %v164 = vunpack.c.l.b16 %v84
  %v165 = vunpack.c.l.b16 %v85
  %v166 = vunpack.c.l.b16 %v86
  %v167 = vunpack.c.l.b16 %v87
  %v168 = vpack.c.b16 %v153, %v152
  %v169 = vpack.c.b16 %v155, %v154
  %v170 = vpack.c.b16 %v157, %v156
  %v171 = vpack.c.b16 %v159, %v158
  %v172 = vpack.c.b16 %v161, %v160
  %v173 = vpack.c.b16 %v163, %v162
  %v174 = vpack.c.b16 %v165, %v164
  %v175 = vpack.c.b16 %v167, %v166
  %184 = vmatpush.bf16.msra.mxu0 %v175
  %185 = vmatpush.bf16.msra.mxu0 %v174
  %186 = vmatpush.bf16.msra.mxu0 %v173
  %187 = vmatpush.bf16.msra.mxu0 %v172
  %188 = vmatpush.bf16.msra.mxu0 %v171
  %189 = vmatpush.bf16.msra.mxu0 %v170
  %190 = vmatpush.bf16.msra.mxu0 %v169
  %191 = vmatpush.bf16.msra.mxu0 %v168
  %192 = vmatmul.bf16.gmra.mxu0 %v120
  %v193 = vpop.f32.mrf.mxu0
  %v194 = vadd.f32 0.0, %v193
  %v195 = vpop.f32.mrf.mxu0
  %v196 = vadd.f32 0.0, %v195
  %197 = vmatmul.bf16.gmra.mxu0 %v121
  %v198 = vpop.f32.mrf.mxu0
  %v199 = vadd.f32 0.0, %v198
  %v200 = vpop.f32.mrf.mxu0
  %v201 = vadd.f32 0.0, %v200
  %202 = vmatmul.bf16.gmra.mxu0 %v122
  %v203 = vpop.f32.mrf.mxu0
  %v204 = vadd.f32 0.0, %v203
  %v205 = vpop.f32.mrf.mxu0
  %v206 = vadd.f32 0.0, %v205
  %207 = vmatmul.bf16.gmra.mxu0 %v123
  %v208 = vpop.f32.mrf.mxu0
  %v209 = vadd.f32 0.0, %v208
  %v210 = vpop.f32.mrf.mxu0
  %v211 = vadd.f32 0.0, %v210
  %212 = vmatmul.bf16.gmra.mxu0 %v124
  %v213 = vpop.f32.mrf.mxu0
  %v214 = vadd.f32 0.0, %v213
  %v215 = vpop.f32.mrf.mxu0
  %v216 = vadd.f32 0.0, %v215
  %217 = vmatmul.bf16.gmra.mxu0 %v125
  %v218 = vpop.f32.mrf.mxu0
  %v219 = vadd.f32 0.0, %v218
  %v220 = vpop.f32.mrf.mxu0
  %v221 = vadd.f32 0.0, %v220
  %222 = vmatmul.bf16.gmra.mxu0 %v126
  %v223 = vpop.f32.mrf.mxu0
  %v224 = vadd.f32 0.0, %v223
  %v225 = vpop.f32.mrf.mxu0
  %v226 = vadd.f32 0.0, %v225
  %227 = vmatmul.bf16.gmra.mxu0 %v127
  %v228 = vpop.f32.mrf.mxu0
  %v229 = vadd.f32 0.0, %v228
  %v230 = vpop.f32.mrf.mxu0
  %v231 = vadd.f32 0.0, %v230
  %232 = vdwg.mxu0
  %v233 = vadd.f32 %v40, %v194
  %v234 = vadd.f32 %v41, %v196
  %v235 = vadd.f32 %v42, %v199
  %v236 = vadd.f32 %v43, %v201
  %v237 = vadd.f32 %v44, %v204
  %v238 = vadd.f32 %v45, %v206
  %v239 = vadd.f32 %v46, %v209
  %v240 = vadd.f32 %v47, %v211
  %v241 = vadd.f32 %v48, %v214
  %v242 = vadd.f32 %v49, %v216
  %v243 = vadd.f32 %v50, %v219
  %v244 = vadd.f32 %v51, %v221
  %v245 = vadd.f32 %v52, %v224
  %v246 = vadd.f32 %v53, %v226
  %v247 = vadd.f32 %v54, %v229
  %v248 = vadd.f32 %v55, %v231
  %249 = vst [vmem:[#allocation2] sm:$0xff] %v233
  %250 = vst [vmem:[#allocation2 + $0x8] sm:$0xff] %v234
  %251 = vst [vmem:[#allocation2 + $0x10] sm:$0xff] %v235
  %252 = vst [vmem:[#allocation2 + $0x18] sm:$0xff] %v236
  %253 = vst [vmem:[#allocation2 + $0x20] sm:$0xff] %v237
  %254 = vst [vmem:[#allocation2 + $0x28] sm:$0xff] %v238
  %255 = vst [vmem:[#allocation2 + $0x30] sm:$0xff] %v239
  %256 = vst [vmem:[#allocation2 + $0x38] sm:$0xff] %v240
  %257 = vst [vmem:[#allocation2 + $0x40] sm:$0xff] %v241
  %258 = vst [vmem:[#allocation2 + $0x48] sm:$0xff] %v242
  %259 = vst [vmem:[#allocation2 + $0x50] sm:$0xff] %v243
  %260 = vst [vmem:[#allocation2 + $0x58] sm:$0xff] %v244
  %261 = vst [vmem:[#allocation2 + $0x60] sm:$0xff] %v245
  %262 = vst [vmem:[#allocation2 + $0x68] sm:$0xff] %v246
  %263 = vst [vmem:[#allocation2 + $0x70] sm:$0xff] %v247
  %264 = vst [vmem:[#allocation2 + $0x78] sm:$0xff] %v248
  // Predicated region
  $region26: #{fraud_gcn_forward.4} parent=0 // pred_check
    %p265 = pneg %p20
  $region27: #{fraud_gcn_forward.4} parent=0 // pred_check_branch
    %267 = sbr.rel (%p265) target = $region29
  $region28: #{fraud_gcn_forward.4} parent=0 // pred_region
    %v268 = vld [vmem:[#allocation2] sm:$0xff]
    %v269 = vld [vmem:[#allocation2 + $0x8] sm:$0xff]
    %v270 = vld [vmem:[#allocation2 + $0x10] sm:$0xff]
    %v271 = vld [vmem:[#allocation2 + $0x18] sm:$0xff]
    %v272 = vld [vmem:[#allocation2 + $0x20] sm:$0xff]
    %v273 = vld [vmem:[#allocation2 + $0x28] sm:$0xff]
    %v274 = vld [vmem:[#allocation2 + $0x30] sm:$0xff]
    %v275 = vld [vmem:[#allocation2 + $0x38] sm:$0xff]
    %v276 = vld [vmem:[#allocation2 + $0x40] sm:$0xff]
    %v277 = vld [vmem:[#allocation2 + $0x48] sm:$0xff]
    %v278 = vld [vmem:[#allocation2 + $0x50] sm:$0xff]
    %v279 = vld [vmem:[#allocation2 + $0x58] sm:$0xff]
    %v280 = vld [vmem:[#allocation2 + $0x60] sm:$0xff]
    %v281 = vld [vmem:[#allocation2 + $0x68] sm:$0xff]
    %v282 = vld [vmem:[#allocation2 + $0x70] sm:$0xff]
    %v283 = vld [vmem:[#allocation2 + $0x78] sm:$0xff]
    %v284 = vld [vmem:[%s2] sm:$0x1]
    %v286 = vperm.slane %v284, 0
    %v288 = vadd.f32 %v268, %v286
    %v289 = vadd.f32 %v269, %v286
    %v290 = vadd.f32 %v270, %v286
    %v291 = vadd.f32 %v271, %v286
    %v292 = vadd.f32 %v272, %v286
    %v293 = vadd.f32 %v273, %v286
    %v294 = vadd.f32 %v274, %v286
    %v295 = vadd.f32 %v275, %v286
    %v296 = vadd.f32 %v276, %v286
    %v297 = vadd.f32 %v277, %v286
    %v298 = vadd.f32 %v278, %v286
    %v299 = vadd.f32 %v279, %v286
    %v300 = vadd.f32 %v280, %v286
    %v301 = vadd.f32 %v281, %v286
    %v302 = vadd.f32 %v282, %v286
    %v303 = vadd.f32 %v283, %v286
    %v304 = vmax.f32 %v288, 0.0
    %v305 = vmax.f32 %v289, 0.0
    %v306 = vmax.f32 %v290, 0.0
    %v307 = vmax.f32 %v291, 0.0
    %v308 = vmax.f32 %v292, 0.0
    %v309 = vmax.f32 %v293, 0.0
    %v310 = vmax.f32 %v294, 0.0
    %v311 = vmax.f32 %v295, 0.0
    %v312 = vmax.f32 %v296, 0.0
    %v313 = vmax.f32 %v297, 0.0
    %v314 = vmax.f32 %v298, 0.0
    %v315 = vmax.f32 %v299, 0.0
    %v316 = vmax.f32 %v300, 0.0
    %v317 = vmax.f32 %v301, 0.0
    %v318 = vmax.f32 %v302, 0.0
    %v319 = vmax.f32 %v303, 0.0
    %v320 = vpack.c.bf16 %v305, %v304
    %v321 = vpack.c.bf16 %v307, %v306
    %v322 = vpack.c.bf16 %v309, %v308
    %v323 = vpack.c.bf16 %v311, %v310
    %v324 = vpack.c.bf16 %v313, %v312
    %v325 = vpack.c.bf16 %v315, %v314
    %v326 = vpack.c.bf16 %v317, %v316
    %v327 = vpack.c.bf16 %v319, %v318
    %v328 = vld [vmem:[%s3] sm:$0xf]
    %v329 = vld [vmem:[%s3 + $0x4] sm:$0xf]
    %v330 = vld [vmem:[%s3 + $0x8] sm:$0xf]
    %v331 = vld [vmem:[%s3 + $0xc] sm:$0xf]
    %v332 = vld [vmem:[%s3 + $0x10] sm:$0xf]
    %v333 = vld [vmem:[%s3 + $0x14] sm:$0xf]
    %v334 = vld [vmem:[%s3 + $0x18] sm:$0xf]
    %v335 = vld [vmem:[%s3 + $0x1c] sm:$0xf]
    %v336 = vld [vmem:[%s3 + $0x20] sm:$0xf]
    %v337 = vld [vmem:[%s3 + $0x24] sm:$0xf]
    %v338 = vld [vmem:[%s3 + $0x28] sm:$0xf]
    %v339 = vld [vmem:[%s3 + $0x2c] sm:$0xf]
    %v340 = vld [vmem:[%s3 + $0x30] sm:$0xf]
    %v341 = vld [vmem:[%s3 + $0x34] sm:$0xf]
    %v342 = vld [vmem:[%s3 + $0x38] sm:$0xf]
    %v343 = vld [vmem:[%s3 + $0x3c] sm:$0xf]
    %v344 = vld [vmem:[%s4] sm:$0x1]
    %v346 = vperm.slane %v344, 0
    %v364 = vunpack.c.l.b16 %v328
    %v365 = vunpack.c.l.b16 %v329
    %v366 = vunpack.c.l.b16 %v330
    %v367 = vunpack.c.l.b16 %v331
    %v368 = vunpack.c.l.b16 %v332
    %v369 = vunpack.c.l.b16 %v333
    %v370 = vunpack.c.l.b16 %v334
    %v371 = vunpack.c.l.b16 %v335
    %v372 = vunpack.c.l.b16 %v336
    %v373 = vunpack.c.l.b16 %v337
    %v374 = vunpack.c.l.b16 %v338
    %v375 = vunpack.c.l.b16 %v339
    %v376 = vunpack.c.l.b16 %v340
    %v377 = vunpack.c.l.b16 %v341
    %v378 = vunpack.c.l.b16 %v342
    %v379 = vunpack.c.l.b16 %v343
    %v380 = vpack.c.b16 %v365, %v364
    %v381 = vpack.c.b16 %v367, %v366
    %v382 = vpack.c.b16 %v369, %v368
    %v383 = vpack.c.b16 %v371, %v370
    %v384 = vpack.c.b16 %v373, %v372
    %v385 = vpack.c.b16 %v375, %v374
    %v386 = vpack.c.b16 %v377, %v376
    %v387 = vpack.c.b16 %v379, %v378
    %396 = vmatpush.bf16.msra.mxu0 %v387
    %397 = vmatpush.bf16.msra.mxu0 %v386
    %398 = vmatpush.bf16.msra.mxu0 %v385
    %399 = vmatpush.bf16.msra.mxu0 %v384
    %400 = vmatpush.bf16.msra.mxu0 %v383
    %401 = vmatpush.bf16.msra.mxu0 %v382
    %402 = vmatpush.bf16.msra.mxu0 %v381
    %403 = vmatpush.bf16.msra.mxu0 %v380
    %404 = vmatmul.bf16.gmra.mxu0 %v320
    %v405 = vpop.f32.mrf.mxu0
    %v406 = vadd.f32 %v346, %v405
    %v407 = vpop.f32.mrf.mxu0
    %v408 = vadd.f32 %v346, %v407
    %409 = vmatmul.bf16.gmra.mxu0 %v321
    %v410 = vpop.f32.mrf.mxu0
    %v411 = vadd.f32 %v346, %v410
    %v412 = vpop.f32.mrf.mxu0
    %v413 = vadd.f32 %v346, %v412
    %414 = vmatmul.bf16.gmra.mxu0 %v322
    %v415 = vpop.f32.mrf.mxu0
    %v416 = vadd.f32 %v346, %v415
    %v417 = vpop.f32.mrf.mxu0
    %v418 = vadd.f32 %v346, %v417
    %419 = vmatmul.bf16.gmra.mxu0 %v323
    %v420 = vpop.f32.mrf.mxu0
    %v421 = vadd.f32 %v346, %v420
    %v422 = vpop.f32.mrf.mxu0
    %v423 = vadd.f32 %v346, %v422
    %424 = vmatmul.bf16.gmra.mxu0 %v324
    %v425 = vpop.f32.mrf.mxu0
    %v426 = vadd.f32 %v346, %v425
    %v427 = vpop.f32.mrf.mxu0
    %v428 = vadd.f32 %v346, %v427
    %429 = vmatmul.bf16.gmra.mxu0 %v325
    %v430 = vpop.f32.mrf.mxu0
    %v431 = vadd.f32 %v346, %v430
    %v432 = vpop.f32.mrf.mxu0
    %v433 = vadd.f32 %v346, %v432
    %434 = vmatmul.bf16.gmra.mxu0 %v326
    %v435 = vpop.f32.mrf.mxu0
    %v436 = vadd.f32 %v346, %v435
    %v437 = vpop.f32.mrf.mxu0
    %v438 = vadd.f32 %v346, %v437
    %439 = vmatmul.bf16.gmra.mxu0 %v327
    %v440 = vpop.f32.mrf.mxu0
    %v441 = vadd.f32 %v346, %v440
    %v442 = vpop.f32.mrf.mxu0
    %v443 = vadd.f32 %v346, %v442
    %444 = vdwg.mxu0
    %v445 = vpack.c.bf16 %v406, %v406
    %v446 = vpack.c.bf16 %v408, %v408
    %v447 = vpack.c.bf16 %v411, %v411
    %v448 = vpack.c.bf16 %v413, %v413
    %v449 = vpack.c.bf16 %v416, %v416
    %v450 = vpack.c.bf16 %v418, %v418
    %v451 = vpack.c.bf16 %v421, %v421
    %v452 = vpack.c.bf16 %v423, %v423
    %v453 = vpack.c.bf16 %v426, %v426
    %v454 = vpack.c.bf16 %v428, %v428
    %v455 = vpack.c.bf16 %v431, %v431
    %v456 = vpack.c.bf16 %v433, %v433
    %v457 = vpack.c.bf16 %v436, %v436
    %v458 = vpack.c.bf16 %v438, %v438
    %v459 = vpack.c.bf16 %v441, %v441
    %v460 = vpack.c.bf16 %v443, %v443
    %461 = vst [vmem:[%s5] sm:$0xf] %v445
    %462 = vst [vmem:[%s5 + $0x4] sm:$0xf] %v446
    %463 = vst [vmem:[%s5 + $0x8] sm:$0xf] %v447
    %464 = vst [vmem:[%s5 + $0xc] sm:$0xf] %v448
    %465 = vst [vmem:[%s5 + $0x10] sm:$0xf] %v449
    %466 = vst [vmem:[%s5 + $0x14] sm:$0xf] %v450
    %467 = vst [vmem:[%s5 + $0x18] sm:$0xf] %v451
    %468 = vst [vmem:[%s5 + $0x1c] sm:$0xf] %v452
    %469 = vst [vmem:[%s5 + $0x20] sm:$0xf] %v453
    %470 = vst [vmem:[%s5 + $0x24] sm:$0xf] %v454
    %471 = vst [vmem:[%s5 + $0x28] sm:$0xf] %v455
    %472 = vst [vmem:[%s5 + $0x2c] sm:$0xf] %v456
    %473 = vst [vmem:[%s5 + $0x30] sm:$0xf] %v457
    %474 = vst [vmem:[%s5 + $0x34] sm:$0xf] %v458
    %475 = vst [vmem:[%s5 + $0x38] sm:$0xf] %v459
    %476 = vst [vmem:[%s5 + $0x3c] sm:$0xf] %v460
  $region29: #{fraud_gcn_forward.4} parent=0 // pred_fallthru
    _
  // Predicated region
  $region30: #{fraud_gcn_forward.4} parent=0 // pred_check
    _
  $region31: #{fraud_gcn_forward.4} parent=0 // pred_check_branch
    %478 = sbr.rel (0) target = $region33
  $region32: #{fraud_gcn_forward.4} parent=0 // pred_region
    _
  $region33: #{fraud_gcn_forward.4} parent=0 // pred_fallthru
    _
  // Predicated region
  $region34: #{fraud_gcn_forward.4} parent=0 // pred_check
    _
  $region35: #{fraud_gcn_forward.4} parent=0 // pred_check_branch
    %480 = sbr.rel (0) target = $region37
  $region36: #{fraud_gcn_forward.4} parent=0 // pred_region
    _
  $region37: #{fraud_gcn_forward.4} parent=0 // pred_fallthru
    _

// kernel: fraud_gcn_forward.5
$region0: #{fraud_gcn_forward.5}
  #allocation0 [shape = 'u32[]', space=smem, size = 0x4, offset = 0x4, fixed_abs, tag = 'smem constant byte address 0x4 - core index']
  #allocation1 [shape = 'u32[72,128]{1,0:T(1,128)}', space=vmem, size = 0x9000, scoped, tag = 'internal scratch']
  #allocation2 [shape = 'f32[128,128]{1,0:T(8,128)}', space=vmem, size = 0x10000, scoped, tag = 'scratch operand']
  %s0 = inlined_call_operand.vmem [shape: bf16[128,128], index: 0, kind: input, shape index: {}]
  %s1 = inlined_call_operand.vmem [shape: bf16[128,128], index: 1, kind: input, shape index: {}]
  %s2 = inlined_call_operand.vmem [shape: f32[1,128], index: 2, kind: input, shape index: {}]
  %s3 = inlined_call_operand.vmem [shape: bf16[128,128], index: 3, kind: input, shape index: {}]
  %s4 = inlined_call_operand.vmem [shape: f32[1,128], index: 4, kind: input, shape index: {}]
  %s5 = inlined_call_operand.vmem [shape: f32[128,128], index: 5, kind: output, shape index: {}]
  %s6 = sld [smem:[#allocation0]]
  $region38: #{fraud_gcn_forward.5} parent=0
    _
  %s8 = ssub.s32 1, %s6
  %s9 = scalar_select 0, %s8, %s6
  // Predicated region
  $region2: #{fraud_gcn_forward.5} parent=0 // pred_check
    _
  $region3: #{fraud_gcn_forward.5} parent=0 // pred_check_branch
    %11 = sbr.rel (0) target = $region5
  $region4: #{fraud_gcn_forward.5} parent=0 // pred_region
    _
  $region5: #{fraud_gcn_forward.5} parent=0 // pred_fallthru
    _
  // Predicated region
  $region6: #{fraud_gcn_forward.5} parent=0 // pred_check
    _
  $region7: #{fraud_gcn_forward.5} parent=0 // pred_check_branch
    %13 = sbr.rel (0) target = $region9
  $region8: #{fraud_gcn_forward.5} parent=0 // pred_region
    _
  $region9: #{fraud_gcn_forward.5} parent=0 // pred_fallthru
    _
  // Predicated region
  $region10: #{fraud_gcn_forward.5} parent=0 // pred_check
    _
  $region11: #{fraud_gcn_forward.5} parent=0 // pred_check_branch
    %15 = sbr.rel (0) target = $region13
  $region12: #{fraud_gcn_forward.5} parent=0 // pred_region
    _
  $region13: #{fraud_gcn_forward.5} parent=0 // pred_fallthru
    _
  // Predicated region
  $region14: #{fraud_gcn_forward.5} parent=0 // pred_check
    _
  $region15: #{fraud_gcn_forward.5} parent=0 // pred_check_branch
    %17 = sbr.rel (0) target = $region17
  $region16: #{fraud_gcn_forward.5} parent=0 // pred_region
    _
  $region17: #{fraud_gcn_forward.5} parent=0 // pred_fallthru
    _
  // Predicated region
  $region18: #{fraud_gcn_forward.5} parent=0 // pred_check
    _
  $region19: #{fraud_gcn_forward.5} parent=0 // pred_check_branch
    %19 = sbr.rel (0) target = $region21
  $region20: #{fraud_gcn_forward.5} parent=0 // pred_region
    _
  $region21: #{fraud_gcn_forward.5} parent=0 // pred_fallthru
    _
  %p20 = scmp.eq.s32.totalorder 0, 0
  // Predicated region
  $region22: #{fraud_gcn_forward.5} parent=0 // pred_check
    %p21 = pneg %p20
  $region23: #{fraud_gcn_forward.5} parent=0 // pred_check_branch
    %23 = sbr.rel (%p21) target = $region25
  $region24: #{fraud_gcn_forward.5} parent=0 // pred_region
    %24 = vst [vmem:[#allocation2] sm:$0xff] 0.0
    %25 = vst [vmem:[#allocation2 + $0x8] sm:$0xff] 0.0
    %26 = vst [vmem:[#allocation2 + $0x10] sm:$0xff] 0.0
    %27 = vst [vmem:[#allocation2 + $0x18] sm:$0xff] 0.0
    %28 = vst [vmem:[#allocation2 + $0x20] sm:$0xff] 0.0
    %29 = vst [vmem:[#allocation2 + $0x28] sm:$0xff] 0.0
    %30 = vst [vmem:[#allocation2 + $0x30] sm:$0xff] 0.0
    %31 = vst [vmem:[#allocation2 + $0x38] sm:$0xff] 0.0
    %32 = vst [vmem:[#allocation2 + $0x40] sm:$0xff] 0.0
    %33 = vst [vmem:[#allocation2 + $0x48] sm:$0xff] 0.0
    %34 = vst [vmem:[#allocation2 + $0x50] sm:$0xff] 0.0
    %35 = vst [vmem:[#allocation2 + $0x58] sm:$0xff] 0.0
    %36 = vst [vmem:[#allocation2 + $0x60] sm:$0xff] 0.0
    %37 = vst [vmem:[#allocation2 + $0x68] sm:$0xff] 0.0
    %38 = vst [vmem:[#allocation2 + $0x70] sm:$0xff] 0.0
    %39 = vst [vmem:[#allocation2 + $0x78] sm:$0xff] 0.0
  $region25: #{fraud_gcn_forward.5} parent=0 // pred_fallthru
    _
  %v40 = vld [vmem:[#allocation2] sm:$0xff]
  %v41 = vld [vmem:[#allocation2 + $0x8] sm:$0xff]
  %v42 = vld [vmem:[#allocation2 + $0x10] sm:$0xff]
  %v43 = vld [vmem:[#allocation2 + $0x18] sm:$0xff]
  %v44 = vld [vmem:[#allocation2 + $0x20] sm:$0xff]
  %v45 = vld [vmem:[#allocation2 + $0x28] sm:$0xff]
  %v46 = vld [vmem:[#allocation2 + $0x30] sm:$0xff]
  %v47 = vld [vmem:[#allocation2 + $0x38] sm:$0xff]
  %v48 = vld [vmem:[#allocation2 + $0x40] sm:$0xff]
  %v49 = vld [vmem:[#allocation2 + $0x48] sm:$0xff]
  %v50 = vld [vmem:[#allocation2 + $0x50] sm:$0xff]
  %v51 = vld [vmem:[#allocation2 + $0x58] sm:$0xff]
  %v52 = vld [vmem:[#allocation2 + $0x60] sm:$0xff]
  %v53 = vld [vmem:[#allocation2 + $0x68] sm:$0xff]
  %v54 = vld [vmem:[#allocation2 + $0x70] sm:$0xff]
  %v55 = vld [vmem:[#allocation2 + $0x78] sm:$0xff]
  %v56 = vld [vmem:[%s0] sm:$0xf]
  %v57 = vld [vmem:[%s0 + $0x4] sm:$0xf]
  %v58 = vld [vmem:[%s0 + $0x8] sm:$0xf]
  %v59 = vld [vmem:[%s0 + $0xc] sm:$0xf]
  %v60 = vld [vmem:[%s0 + $0x10] sm:$0xf]
  %v61 = vld [vmem:[%s0 + $0x14] sm:$0xf]
  %v62 = vld [vmem:[%s0 + $0x18] sm:$0xf]
  %v63 = vld [vmem:[%s0 + $0x1c] sm:$0xf]
  %v64 = vld [vmem:[%s0 + $0x20] sm:$0xf]
  %v65 = vld [vmem:[%s0 + $0x24] sm:$0xf]
  %v66 = vld [vmem:[%s0 + $0x28] sm:$0xf]
  %v67 = vld [vmem:[%s0 + $0x2c] sm:$0xf]
  %v68 = vld [vmem:[%s0 + $0x30] sm:$0xf]
  %v69 = vld [vmem:[%s0 + $0x34] sm:$0xf]
  %v70 = vld [vmem:[%s0 + $0x38] sm:$0xf]
  %v71 = vld [vmem:[%s0 + $0x3c] sm:$0xf]
  %v72 = vld [vmem:[%s1] sm:$0xf]
  %v73 = vld [vmem:[%s1 + $0x4] sm:$0xf]
  %v74 = vld [vmem:[%s1 + $0x8] sm:$0xf]
  %v75 = vld [vmem:[%s1 + $0xc] sm:$0xf]
  %v76 = vld [vmem:[%s1 + $0x10] sm:$0xf]
  %v77 = vld [vmem:[%s1 + $0x14] sm:$0xf]
  %v78 = vld [vmem:[%s1 + $0x18] sm:$0xf]
  %v79 = vld [vmem:[%s1 + $0x1c] sm:$0xf]
  %v80 = vld [vmem:[%s1 + $0x20] sm:$0xf]
  %v81 = vld [vmem:[%s1 + $0x24] sm:$0xf]
  %v82 = vld [vmem:[%s1 + $0x28] sm:$0xf]
  %v83 = vld [vmem:[%s1 + $0x2c] sm:$0xf]
  %v84 = vld [vmem:[%s1 + $0x30] sm:$0xf]
  %v85 = vld [vmem:[%s1 + $0x34] sm:$0xf]
  %v86 = vld [vmem:[%s1 + $0x38] sm:$0xf]
  %v87 = vld [vmem:[%s1 + $0x3c] sm:$0xf]
  %v104 = vunpack.c.l.b16 %v56
  %v105 = vunpack.c.l.b16 %v57
  %v106 = vunpack.c.l.b16 %v58
  %v107 = vunpack.c.l.b16 %v59
  %v108 = vunpack.c.l.b16 %v60
  %v109 = vunpack.c.l.b16 %v61
  %v110 = vunpack.c.l.b16 %v62
  %v111 = vunpack.c.l.b16 %v63
  %v112 = vunpack.c.l.b16 %v64
  %v113 = vunpack.c.l.b16 %v65
  %v114 = vunpack.c.l.b16 %v66
  %v115 = vunpack.c.l.b16 %v67
  %v116 = vunpack.c.l.b16 %v68
  %v117 = vunpack.c.l.b16 %v69
  %v118 = vunpack.c.l.b16 %v70
  %v119 = vunpack.c.l.b16 %v71
  %v120 = vpack.c.b16 %v105, %v104
  %v121 = vpack.c.b16 %v107, %v106
  %v122 = vpack.c.b16 %v109, %v108
  %v123 = vpack.c.b16 %v111, %v110
  %v124 = vpack.c.b16 %v113, %v112
  %v125 = vpack.c.b16 %v115, %v114
  %v126 = vpack.c.b16 %v117, %v116
  %v127 = vpack.c.b16 %v119, %v118
  %v152 = vunpack.c.l.b16 %v72
  %v153 = vunpack.c.l.b16 %v73
  %v154 = vunpack.c.l.b16 %v74
  %v155 = vunpack.c.l.b16 %v75
  %v156 = vunpack.c.l.b16 %v76
  %v157 = vunpack.c.l.b16 %v77
  %v158 = vunpack.c.l.b16 %v78
  %v159 = vunpack.c.l.b16 %v79
  %v160 = vunpack.c.l.b16 %v80
  %v161 = vunpack.c.l.b16 %v81
  %v162 = vunpack.c.l.b16 %v82
  %v163 = vunpack.c.l.b16 %v83
  %v164 = vunpack.c.l.b16 %v84
  %v165 = vunpack.c.l.b16 %v85
  %v166 = vunpack.c.l.b16 %v86
  %v167 = vunpack.c.l.b16 %v87
  %v168 = vpack.c.b16 %v153, %v152
  %v169 = vpack.c.b16 %v155, %v154
  %v170 = vpack.c.b16 %v157, %v156
  %v171 = vpack.c.b16 %v159, %v158
  %v172 = vpack.c.b16 %v161, %v160
  %v173 = vpack.c.b16 %v163, %v162
  %v174 = vpack.c.b16 %v165, %v164
  %v175 = vpack.c.b16 %v167, %v166
  %184 = vmatpush.bf16.msra.mxu0 %v175
  %185 = vmatpush.bf16.msra.mxu0 %v174
  %186 = vmatpush.bf16.msra.mxu0 %v173
  %187 = vmatpush.bf16.msra.mxu0 %v172
  %188 = vmatpush.bf16.msra.mxu0 %v171
  %189 = vmatpush.bf16.msra.mxu0 %v170
  %190 = vmatpush.bf16.msra.mxu0 %v169
  %191 = vmatpush.bf16.msra.mxu0 %v168
  %192 = vmatmul.bf16.gmra.mxu0 %v120
  %v193 = vpop.f32.mrf.mxu0
  %v194 = vadd.f32 0.0, %v193
  %v195 = vpop.f32.mrf.mxu0
  %v196 = vadd.f32 0.0, %v195
  %197 = vmatmul.bf16.gmra.mxu0 %v121
  %v198 = vpop.f32.mrf.mxu0
  %v199 = vadd.f32 0.0, %v198
  %v200 = vpop.f32.mrf.mxu0
  %v201 = vadd.f32 0.0, %v200
  %202 = vmatmul.bf16.gmra.mxu0 %v122
  %v203 = vpop.f32.mrf.mxu0
  %v204 = vadd.f32 0.0, %v203
  %v205 = vpop.f32.mrf.mxu0
  %v206 = vadd.f32 0.0, %v205
  %207 = vmatmul.bf16.gmra.mxu0 %v123
  %v208 = vpop.f32.mrf.mxu0
  %v209 = vadd.f32 0.0, %v208
  %v210 = vpop.f32.mrf.mxu0
  %v211 = vadd.f32 0.0, %v210
  %212 = vmatmul.bf16.gmra.mxu0 %v124
  %v213 = vpop.f32.mrf.mxu0
  %v214 = vadd.f32 0.0, %v213
  %v215 = vpop.f32.mrf.mxu0
  %v216 = vadd.f32 0.0, %v215
  %217 = vmatmul.bf16.gmra.mxu0 %v125
  %v218 = vpop.f32.mrf.mxu0
  %v219 = vadd.f32 0.0, %v218
  %v220 = vpop.f32.mrf.mxu0
  %v221 = vadd.f32 0.0, %v220
  %222 = vmatmul.bf16.gmra.mxu0 %v126
  %v223 = vpop.f32.mrf.mxu0
  %v224 = vadd.f32 0.0, %v223
  %v225 = vpop.f32.mrf.mxu0
  %v226 = vadd.f32 0.0, %v225
  %227 = vmatmul.bf16.gmra.mxu0 %v127
  %v228 = vpop.f32.mrf.mxu0
  %v229 = vadd.f32 0.0, %v228
  %v230 = vpop.f32.mrf.mxu0
  %v231 = vadd.f32 0.0, %v230
  %232 = vdwg.mxu0
  %v233 = vadd.f32 %v40, %v194
  %v234 = vadd.f32 %v41, %v196
  %v235 = vadd.f32 %v42, %v199
  %v236 = vadd.f32 %v43, %v201
  %v237 = vadd.f32 %v44, %v204
  %v238 = vadd.f32 %v45, %v206
  %v239 = vadd.f32 %v46, %v209
  %v240 = vadd.f32 %v47, %v211
  %v241 = vadd.f32 %v48, %v214
  %v242 = vadd.f32 %v49, %v216
  %v243 = vadd.f32 %v50, %v219
  %v244 = vadd.f32 %v51, %v221
  %v245 = vadd.f32 %v52, %v224
  %v246 = vadd.f32 %v53, %v226
  %v247 = vadd.f32 %v54, %v229
  %v248 = vadd.f32 %v55, %v231
  %249 = vst [vmem:[#allocation2] sm:$0xff] %v233
  %250 = vst [vmem:[#allocation2 + $0x8] sm:$0xff] %v234
  %251 = vst [vmem:[#allocation2 + $0x10] sm:$0xff] %v235
  %252 = vst [vmem:[#allocation2 + $0x18] sm:$0xff] %v236
  %253 = vst [vmem:[#allocation2 + $0x20] sm:$0xff] %v237
  %254 = vst [vmem:[#allocation2 + $0x28] sm:$0xff] %v238
  %255 = vst [vmem:[#allocation2 + $0x30] sm:$0xff] %v239
  %256 = vst [vmem:[#allocation2 + $0x38] sm:$0xff] %v240
  %257 = vst [vmem:[#allocation2 + $0x40] sm:$0xff] %v241
  %258 = vst [vmem:[#allocation2 + $0x48] sm:$0xff] %v242
  %259 = vst [vmem:[#allocation2 + $0x50] sm:$0xff] %v243
  %260 = vst [vmem:[#allocation2 + $0x58] sm:$0xff] %v244
  %261 = vst [vmem:[#allocation2 + $0x60] sm:$0xff] %v245
  %262 = vst [vmem:[#allocation2 + $0x68] sm:$0xff] %v246
  %263 = vst [vmem:[#allocation2 + $0x70] sm:$0xff] %v247
  %264 = vst [vmem:[#allocation2 + $0x78] sm:$0xff] %v248
  // Predicated region
  $region26: #{fraud_gcn_forward.5} parent=0 // pred_check
    %p265 = pneg %p20
  $region27: #{fraud_gcn_forward.5} parent=0 // pred_check_branch
    %267 = sbr.rel (%p265) target = $region29
  $region28: #{fraud_gcn_forward.5} parent=0 // pred_region
    %v268 = vld [vmem:[#allocation2] sm:$0xff]
    %v269 = vld [vmem:[#allocation2 + $0x8] sm:$0xff]
    %v270 = vld [vmem:[#allocation2 + $0x10] sm:$0xff]
    %v271 = vld [vmem:[#allocation2 + $0x18] sm:$0xff]
    %v272 = vld [vmem:[#allocation2 + $0x20] sm:$0xff]
    %v273 = vld [vmem:[#allocation2 + $0x28] sm:$0xff]
    %v274 = vld [vmem:[#allocation2 + $0x30] sm:$0xff]
    %v275 = vld [vmem:[#allocation2 + $0x38] sm:$0xff]
    %v276 = vld [vmem:[#allocation2 + $0x40] sm:$0xff]
    %v277 = vld [vmem:[#allocation2 + $0x48] sm:$0xff]
    %v278 = vld [vmem:[#allocation2 + $0x50] sm:$0xff]
    %v279 = vld [vmem:[#allocation2 + $0x58] sm:$0xff]
    %v280 = vld [vmem:[#allocation2 + $0x60] sm:$0xff]
    %v281 = vld [vmem:[#allocation2 + $0x68] sm:$0xff]
    %v282 = vld [vmem:[#allocation2 + $0x70] sm:$0xff]
    %v283 = vld [vmem:[#allocation2 + $0x78] sm:$0xff]
    %v284 = vld [vmem:[%s2] sm:$0x1]
    %v286 = vperm.slane %v284, 0
    %v288 = vadd.f32 %v268, %v286
    %v289 = vadd.f32 %v269, %v286
    %v290 = vadd.f32 %v270, %v286
    %v291 = vadd.f32 %v271, %v286
    %v292 = vadd.f32 %v272, %v286
    %v293 = vadd.f32 %v273, %v286
    %v294 = vadd.f32 %v274, %v286
    %v295 = vadd.f32 %v275, %v286
    %v296 = vadd.f32 %v276, %v286
    %v297 = vadd.f32 %v277, %v286
    %v298 = vadd.f32 %v278, %v286
    %v299 = vadd.f32 %v279, %v286
    %v300 = vadd.f32 %v280, %v286
    %v301 = vadd.f32 %v281, %v286
    %v302 = vadd.f32 %v282, %v286
    %v303 = vadd.f32 %v283, %v286
    %v304 = vmax.f32 %v288, 0.0
    %v305 = vmax.f32 %v289, 0.0
    %v306 = vmax.f32 %v290, 0.0
    %v307 = vmax.f32 %v291, 0.0
    %v308 = vmax.f32 %v292, 0.0
    %v309 = vmax.f32 %v293, 0.0
    %v310 = vmax.f32 %v294, 0.0
    %v311 = vmax.f32 %v295, 0.0
    %v312 = vmax.f32 %v296, 0.0
    %v313 = vmax.f32 %v297, 0.0
    %v314 = vmax.f32 %v298, 0.0
    %v315 = vmax.f32 %v299, 0.0
    %v316 = vmax.f32 %v300, 0.0
    %v317 = vmax.f32 %v301, 0.0
    %v318 = vmax.f32 %v302, 0.0
    %v319 = vmax.f32 %v303, 0.0
    %v320 = vpack.c.bf16 %v305, %v304
    %v321 = vpack.c.bf16 %v307, %v306
    %v322 = vpack.c.bf16 %v309, %v308
    %v323 = vpack.c.bf16 %v311, %v310
    %v324 = vpack.c.bf16 %v313, %v312
    %v325 = vpack.c.bf16 %v315, %v314
    %v326 = vpack.c.bf16 %v317, %v316
    %v327 = vpack.c.bf16 %v319, %v318
    %v328 = vld [vmem:[%s3] sm:$0xf]
    %v329 = vld [vmem:[%s3 + $0x4] sm:$0xf]
    %v330 = vld [vmem:[%s3 + $0x8] sm:$0xf]
    %v331 = vld [vmem:[%s3 + $0xc] sm:$0xf]
    %v332 = vld [vmem:[%s3 + $0x10] sm:$0xf]
    %v333 = vld [vmem:[%s3 + $0x14] sm:$0xf]
    %v334 = vld [vmem:[%s3 + $0x18] sm:$0xf]
    %v335 = vld [vmem:[%s3 + $0x1c] sm:$0xf]
    %v336 = vld [vmem:[%s3 + $0x20] sm:$0xf]
    %v337 = vld [vmem:[%s3 + $0x24] sm:$0xf]
    %v338 = vld [vmem:[%s3 + $0x28] sm:$0xf]
    %v339 = vld [vmem:[%s3 + $0x2c] sm:$0xf]
    %v340 = vld [vmem:[%s3 + $0x30] sm:$0xf]
    %v341 = vld [vmem:[%s3 + $0x34] sm:$0xf]
    %v342 = vld [vmem:[%s3 + $0x38] sm:$0xf]
    %v343 = vld [vmem:[%s3 + $0x3c] sm:$0xf]
    %v344 = vld [vmem:[%s4] sm:$0x1]
    %v346 = vperm.slane %v344, 0
    %v364 = vunpack.c.l.b16 %v328
    %v365 = vunpack.c.l.b16 %v329
    %v366 = vunpack.c.l.b16 %v330
    %v367 = vunpack.c.l.b16 %v331
    %v368 = vunpack.c.l.b16 %v332
    %v369 = vunpack.c.l.b16 %v333
    %v370 = vunpack.c.l.b16 %v334
    %v371 = vunpack.c.l.b16 %v335
    %v372 = vunpack.c.l.b16 %v336
    %v373 = vunpack.c.l.b16 %v337
    %v374 = vunpack.c.l.b16 %v338
    %v375 = vunpack.c.l.b16 %v339
    %v376 = vunpack.c.l.b16 %v340
    %v377 = vunpack.c.l.b16 %v341
    %v378 = vunpack.c.l.b16 %v342
    %v379 = vunpack.c.l.b16 %v343
    %v380 = vpack.c.b16 %v365, %v364
    %v381 = vpack.c.b16 %v367, %v366
    %v382 = vpack.c.b16 %v369, %v368
    %v383 = vpack.c.b16 %v371, %v370
    %v384 = vpack.c.b16 %v373, %v372
    %v385 = vpack.c.b16 %v375, %v374
    %v386 = vpack.c.b16 %v377, %v376
    %v387 = vpack.c.b16 %v379, %v378
    %396 = vmatpush.bf16.msra.mxu0 %v387
    %397 = vmatpush.bf16.msra.mxu0 %v386
    %398 = vmatpush.bf16.msra.mxu0 %v385
    %399 = vmatpush.bf16.msra.mxu0 %v384
    %400 = vmatpush.bf16.msra.mxu0 %v383
    %401 = vmatpush.bf16.msra.mxu0 %v382
    %402 = vmatpush.bf16.msra.mxu0 %v381
    %403 = vmatpush.bf16.msra.mxu0 %v380
    %404 = vmatmul.bf16.gmra.mxu0 %v320
    %v405 = vpop.f32.mrf.mxu0
    %v406 = vadd.f32 %v346, %v405
    %v407 = vpop.f32.mrf.mxu0
    %v408 = vadd.f32 %v346, %v407
    %409 = vmatmul.bf16.gmra.mxu0 %v321
    %v410 = vpop.f32.mrf.mxu0
    %v411 = vadd.f32 %v346, %v410
    %v412 = vpop.f32.mrf.mxu0
    %v413 = vadd.f32 %v346, %v412
    %414 = vmatmul.bf16.gmra.mxu0 %v322
    %v415 = vpop.f32.mrf.mxu0
    %v416 = vadd.f32 %v346, %v415
    %v417 = vpop.f32.mrf.mxu0
    %v418 = vadd.f32 %v346, %v417
    %419 = vmatmul.bf16.gmra.mxu0 %v323
    %v420 = vpop.f32.mrf.mxu0
    %v421 = vadd.f32 %v346, %v420
    %v422 = vpop.f32.mrf.mxu0
    %v423 = vadd.f32 %v346, %v422
    %424 = vmatmul.bf16.gmra.mxu0 %v324
    %v425 = vpop.f32.mrf.mxu0
    %v426 = vadd.f32 %v346, %v425
    %v427 = vpop.f32.mrf.mxu0
    %v428 = vadd.f32 %v346, %v427
    %429 = vmatmul.bf16.gmra.mxu0 %v325
    %v430 = vpop.f32.mrf.mxu0
    %v431 = vadd.f32 %v346, %v430
    %v432 = vpop.f32.mrf.mxu0
    %v433 = vadd.f32 %v346, %v432
    %434 = vmatmul.bf16.gmra.mxu0 %v326
    %v435 = vpop.f32.mrf.mxu0
    %v436 = vadd.f32 %v346, %v435
    %v437 = vpop.f32.mrf.mxu0
    %v438 = vadd.f32 %v346, %v437
    %439 = vmatmul.bf16.gmra.mxu0 %v327
    %v440 = vpop.f32.mrf.mxu0
    %v441 = vadd.f32 %v346, %v440
    %v442 = vpop.f32.mrf.mxu0
    %v443 = vadd.f32 %v346, %v442
    %444 = vdwg.mxu0
    %445 = vst [vmem:[%s5] sm:$0xff] %v406
    %446 = vst [vmem:[%s5 + $0x8] sm:$0xff] %v408
    %447 = vst [vmem:[%s5 + $0x10] sm:$0xff] %v411
    %448 = vst [vmem:[%s5 + $0x18] sm:$0xff] %v413
    %449 = vst [vmem:[%s5 + $0x20] sm:$0xff] %v416
    %450 = vst [vmem:[%s5 + $0x28] sm:$0xff] %v418
    %451 = vst [vmem:[%s5 + $0x30] sm:$0xff] %v421
    %452 = vst [vmem:[%s5 + $0x38] sm:$0xff] %v423
    %453 = vst [vmem:[%s5 + $0x40] sm:$0xff] %v426
    %454 = vst [vmem:[%s5 + $0x48] sm:$0xff] %v428
    %455 = vst [vmem:[%s5 + $0x50] sm:$0xff] %v431
    %456 = vst [vmem:[%s5 + $0x58] sm:$0xff] %v433
    %457 = vst [vmem:[%s5 + $0x60] sm:$0xff] %v436
    %458 = vst [vmem:[%s5 + $0x68] sm:$0xff] %v438
    %459 = vst [vmem:[%s5 + $0x70] sm:$0xff] %v441
    %460 = vst [vmem:[%s5 + $0x78] sm:$0xff] %v443
  $region29: #{fraud_gcn_forward.5} parent=0 // pred_fallthru
    _
  // Predicated region
  $region30: #{fraud_gcn_forward.5} parent=0 // pred_check
    _
  $region31: #{fraud_gcn_forward.5} parent=0 // pred_check_branch
    %462 = sbr.rel (0) target = $region33
  $region32: #{fraud_gcn_forward.5} parent=0 // pred_region
    _
  $region33: #{fraud_gcn_forward.5} parent=0 // pred_fallthru
    _
  // Predicated region
  $region34: #{fraud_gcn_forward.5} parent=0 // pred_check
    _
  $region35: #{fraud_gcn_forward.5} parent=0 // pred_check_branch
    %464 = sbr.rel (0) target = $region37
  $region36: #{fraud_gcn_forward.5} parent=0 // pred_region
    _
  $region37: #{fraud_gcn_forward.5} parent=0 // pred_fallthru
    _

</llo_original>
